<compile_context>
chip_gen: v6e
topology: v6e:2x2x1
jax: 0.10.0
libtpu: 0.0.40
codegen_flags: <defaults>
</compile_context>

<pallas_src>
import jax
import jax.numpy as jnp
from jax.experimental import pallas as pl
from jax.experimental.pallas import tpu as pltpu


def swiglu_mlp_kernel(x_ref, wgu_ref, bgu_ref, wd_ref, bd_ref, o_ref):
    H = wd_ref.shape[0]                               # hidden width (4 * D)
    x = x_ref[...]                                    # (tm, D)
    # Fused gate|up projection: one MXU pass, f32 accumulation -> (tm, 2H).
    gu = jnp.dot(x, wgu_ref[...], preferred_element_type=jnp.float32) + bgu_ref[...]
    g = gu[:, :H]                                     # 128-lane-aligned slice
    u = gu[:, H:]                                     # 128-lane-aligned slice
    # SwiGLU: silu(g) * u   (sigmoid -> EUP slot; muls -> VPU).
    h = (g * jax.nn.sigmoid(g)) * u                   # (tm, H), f32
    # TODO(synk): Dropout layers are identity here (inference / p=0); training
    # mode would build masks via pltpu.prng_seed + pltpu.prng_random_bits.
    o = jnp.dot(h.astype(x.dtype), wd_ref[...],
                preferred_element_type=jnp.float32) + bd_ref[...]
    o_ref[...] = o.astype(o_ref.dtype)


def _round_up(v, m):
    return ((v + m - 1) // m) * m


def swiglu_mlp(x, wg, bg, wu, bu, wd, bd, *, tm=1024):
    """x: (B, T, D). Weights stored transposed relative to nn.Linear:
       wg, wu: (D, H); wd: (H, D); biases as (1, H) / (1, D).
       tm is the requested token-row tile; it is auto-shrunk to fit a
       conservative per-step VMEM budget and rounded to the sublane multiple."""
    B, T, D = x.shape
    H = wg.shape[1]
    M = B * T
    itemsize = jnp.dtype(x.dtype).itemsize

    # Fuse gate/up weights so the first layer is a single (D, 2H) matmul.
    w_gu = jnp.concatenate([wg, wu], axis=1)          # (D, 2H)
    b_gu = jnp.concatenate([bg, bu], axis=1)          # (1, 2H)

    # --- VMEM-aware row-tile selection ---------------------------------------
    # Per-row footprint: double-buffered x/out tiles + f32 intermediates
    # (gu: 2H, h: H, o: D).  Weights are a fixed (resident) cost.
    per_row = 2 * 2 * D * itemsize + 4 * (2 * H + H + D)
    fixed = 2 * itemsize * (D * 2 * H + 2 * H + H * D + D)
    budget = 12 * 1024 * 1024                         # fits v5e's 16 MiB default
    tm_fit = max(8, (budget - fixed) // max(per_row, 1))
    tm = max(8, min(tm, tm_fit, _round_up(M, 8)))
    tm = _round_up(tm, 8)

    n_tiles = pl.cdiv(M, tm)
    Mp = n_tiles * tm                                 # padded row count

    x2 = x.reshape(M, D)
    if Mp != M:
        x2 = jnp.pad(x2, ((0, Mp - M), (0, 0)))       # ragged tail -> zero rows

    cost = pl.CostEstimate(
        flops=6 * Mp * D * H,                         # 2*M*D*(2H) + 2*M*H*D
        transcendentals=Mp * H,                       # sigmoid in silu
        bytes_accessed=(2 * Mp * D + 3 * D * H + 2 * H + D) * itemsize,
    )

    out = pl.pallas_call(
        swiglu_mlp_kernel,
        out_shape=jax.ShapeDtypeStruct((Mp, D), x.dtype),
        grid_spec=pltpu.PrefetchScalarGridSpec(
            num_scalar_prefetch=0,
            grid=(n_tiles,),
            in_specs=[
                pl.BlockSpec((tm, D), lambda i: (i, 0)),       # x rows
                pl.BlockSpec((D, 2 * H), lambda i: (0, 0)),    # fused W_gate|W_up
                pl.BlockSpec((1, 2 * H), lambda i: (0, 0)),    # fused b_gate|b_up
                pl.BlockSpec((H, D), lambda i: (0, 0)),        # W_down
                pl.BlockSpec((1, D), lambda i: (0, 0)),        # b_down
            ],
            out_specs=pl.BlockSpec((tm, D), lambda i: (i, 0)),
        ),
        compiler_params=pltpu.CompilerParams(
            dimension_semantics=("parallel",)),        # v7x: shard tiles over 2 TCs
        cost_estimate=cost,
    )(x2, w_gu, b_gu, wd, bd)
    return out[:M].reshape(B, T, D)


if __name__ == "__main__":
    # Small shapes consistent with the module: model_dim D=32, hidden H=4*D=128.
    B, T, D = 2, 8, 32
    H = 4 * D

    key = jax.random.PRNGKey(0)
    kx, kg, kbg, ku, kbu, kd, kbd = jax.random.split(key, 7)

    x = jax.random.normal(kx, (B, T, D), dtype=jnp.float32)
    # Deterministic parameter init (Linear-like scaling).
    wg = jax.random.normal(kg, (D, H), dtype=jnp.float32) / jnp.sqrt(D)
    bg = jax.random.normal(kbg, (1, H), dtype=jnp.float32) * 0.01
    wu = jax.random.normal(ku, (D, H), dtype=jnp.float32) / jnp.sqrt(D)
    bu = jax.random.normal(kbu, (1, H), dtype=jnp.float32) * 0.01
    wd = jax.random.normal(kd, (H, D), dtype=jnp.float32) / jnp.sqrt(H)
    bd = jax.random.normal(kbd, (1, D), dtype=jnp.float32) * 0.01

    out = swiglu_mlp(x, wg, bg, wu, bu, wd, bd)
    out = jax.block_until_ready(out)

    # Pure-JAX reference for sanity.
    g = x.reshape(-1, D) @ wg + bg
    u = x.reshape(-1, D) @ wu + bu
    ref = ((g * jax.nn.sigmoid(g)) * u) @ wd + bd
    ref = ref.reshape(B, T, D)
    assert jnp.allclose(out, ref, atol=1e-4, rtol=1e-4), "mismatch vs reference"

    print("KERNEL_OK")
</pallas_src>

<mosaic_0001>
module attributes {stable_mosaic.version = 11 : i64} {
  func.func @swiglu_mlp_kernel(%arg0: i32, %arg1: memref<16x32xf32, #tpu.memory_space<vmem>>, %arg2: memref<32x256xf32, #tpu.memory_space<vmem>>, %arg3: memref<1x256xf32, #tpu.memory_space<vmem>>, %arg4: memref<128x32xf32, #tpu.memory_space<vmem>>, %arg5: memref<1x32xf32, #tpu.memory_space<vmem>>, %arg6: memref<16x32xf32, #tpu.memory_space<vmem>>) attributes {dimension_semantics = [#tpu.dimension_semantics<parallel>], iteration_bounds = array<i64: 1>, scalar_prefetch = 0 : i64, scratch_operands = 0 : i64, tpu.core_type = #tpu.core_type<tc>, window_params = [{transform_indices = @transform_0, window_bounds = array<i64: 16, 32>}, {pipeline_mode = #tpu.pipeline_mode<synchronous>, transform_indices = @transform_1, window_bounds = array<i64: 32, 256>}, {pipeline_mode = #tpu.pipeline_mode<synchronous>, transform_indices = @transform_2, window_bounds = array<i64: 1, 256>}, {pipeline_mode = #tpu.pipeline_mode<synchronous>, transform_indices = @transform_3, window_bounds = array<i64: 128, 32>}, {pipeline_mode = #tpu.pipeline_mode<synchronous>, transform_indices = @transform_4, window_bounds = array<i64: 1, 32>}, {transform_indices = @transform_5, window_bounds = array<i64: 16, 32>}]} {
    %c0 = arith.constant 0 : index
    %c0_0 = arith.constant 0 : index
    %0 = vector.load %arg1[%c0, %c0_0] : memref<16x32xf32, #tpu.memory_space<vmem>>, vector<16x32xf32>
    %c0_1 = arith.constant 0 : index
    %c0_2 = arith.constant 0 : index
    %1 = vector.load %arg2[%c0_1, %c0_2] : memref<32x256xf32, #tpu.memory_space<vmem>>, vector<32x256xf32>
    %cst = arith.constant dense<0.000000e+00> : vector<16x256xf32>
    %2 = tpu.matmul %0, %1, %cst {dimension_numbers = #tpu.dot_dimension_numbers<[1], [0], [0], [1], [0, 0, 1, 1], [], []>} : vector<16x32xf32>, vector<32x256xf32>, vector<16x256xf32> -> vector<16x256xf32>
    %c0_3 = arith.constant 0 : index
    %c0_4 = arith.constant 0 : index
    %3 = vector.load %arg3[%c0_3, %c0_4] : memref<1x256xf32, #tpu.memory_space<vmem>>, vector<1x256xf32>
    %4 = vector.broadcast %3 : vector<1x256xf32> to vector<16x256xf32>
    %5 = arith.addf %2, %4 : vector<16x256xf32>
    %6 = vector.extract_strided_slice %5 {offsets = [0, 0], sizes = [16, 128], strides = [1, 1]} : vector<16x256xf32> to vector<16x128xf32>
    %7 = vector.extract_strided_slice %5 {offsets = [0, 128], sizes = [16, 128], strides = [1, 1]} : vector<16x256xf32> to vector<16x128xf32>
    %8 = arith.negf %6 : vector<16x128xf32>
    %9 = math.exp %8 : vector<16x128xf32>
    %cst_5 = arith.constant 1.000000e+00 : f32
    %10 = vector.broadcast %cst_5 : f32 to vector<16x128xf32>
    %11 = arith.addf %10, %9 : vector<16x128xf32>
    %12 = arith.divf %10, %11 : vector<16x128xf32>
    %13 = arith.mulf %6, %12 : vector<16x128xf32>
    %14 = arith.mulf %13, %7 : vector<16x128xf32>
    %c0_6 = arith.constant 0 : index
    %c0_7 = arith.constant 0 : index
    %15 = vector.load %arg4[%c0_6, %c0_7] : memref<128x32xf32, #tpu.memory_space<vmem>>, vector<128x32xf32>
    %cst_8 = arith.constant dense<0.000000e+00> : vector<16x32xf32>
    %16 = tpu.matmul %14, %15, %cst_8 {dimension_numbers = #tpu.dot_dimension_numbers<[1], [0], [0], [1], [0, 0, 1, 1], [], []>} : vector<16x128xf32>, vector<128x32xf32>, vector<16x32xf32> -> vector<16x32xf32>
    %c0_9 = arith.constant 0 : index
    %c0_10 = arith.constant 0 : index
    %17 = vector.load %arg5[%c0_9, %c0_10] : memref<1x32xf32, #tpu.memory_space<vmem>>, vector<1x32xf32>
    %18 = vector.broadcast %17 : vector<1x32xf32> to vector<16x32xf32>
    %19 = arith.addf %16, %18 : vector<16x32xf32>
    %c0_11 = arith.constant 0 : index
    %c0_12 = arith.constant 0 : index
    %20 = vector.load %arg6[%c0_11, %c0_12] : memref<16x32xf32, #tpu.memory_space<vmem>>, vector<16x32xf32>
    tpu.vector_store %arg6[%c0_11, %c0_12], %19 {strides = array<i32>} : memref<16x32xf32, #tpu.memory_space<vmem>>, vector<16x32xf32>,
    return
  }
  func.func @transform_0(%arg0: i32) -> (i32, i32) {
    %c0_i32 = arith.constant 0 : i32
    %c0_i32_0 = arith.constant 0 : i32
    return %arg0, %c0_i32 : i32, i32
  }
  func.func @transform_1(%arg0: i32) -> (i32, i32) {
    %c0_i32 = arith.constant 0 : i32
    %c0_i32_0 = arith.constant 0 : i32
    %c0_i32_1 = arith.constant 0 : i32
    return %c0_i32, %c0_i32_0 : i32, i32
  }
  func.func @transform_2(%arg0: i32) -> (i32, i32) {
    %c0_i32 = arith.constant 0 : i32
    %c0_i32_0 = arith.constant 0 : i32
    %c0_i32_1 = arith.constant 0 : i32
    return %c0_i32, %c0_i32_0 : i32, i32
  }
  func.func @transform_3(%arg0: i32) -> (i32, i32) {
    %c0_i32 = arith.constant 0 : i32
    %c0_i32_0 = arith.constant 0 : i32
    %c0_i32_1 = arith.constant 0 : i32
    return %c0_i32, %c0_i32_0 : i32, i32
  }
  func.func @transform_4(%arg0: i32) -> (i32, i32) {
    %c0_i32 = arith.constant 0 : i32
    %c0_i32_0 = arith.constant 0 : i32
    %c0_i32_1 = arith.constant 0 : i32
    return %c0_i32, %c0_i32_0 : i32, i32
  }
  func.func @transform_5(%arg0: i32) -> (i32, i32) {
    %c0_i32 = arith.constant 0 : i32
    %c0_i32_0 = arith.constant 0 : i32
    return %arg0, %c0_i32 : i32, i32
  }
}

</mosaic_0001>

<llo_original>
// kernel: tpu_custom_call.1
$region0: #{tpu_custom_call.1}
  #allocation0 [shape = 'u32[]', space=smem, size = 0x4, offset = 0x4, fixed_abs, tag = 'smem constant byte address 0x4 - core index']
  #allocation1 [shape = 'u32[144,128]{1,0:T(1,128)}', space=vmem, size = 0x12000, scoped, tag = 'internal scratch']
  %s0 = inlined_call_operand.vmem [shape: f32[16,32], index: 0, kind: input, shape index: {}]
  %s1 = inlined_call_operand.vmem [shape: f32[32,256], index: 1, kind: input, shape index: {}]
  %s2 = inlined_call_operand.vmem [shape: f32[1,256], index: 2, kind: input, shape index: {}]
  %s3 = inlined_call_operand.vmem [shape: f32[128,32], index: 3, kind: input, shape index: {}]
  %s4 = inlined_call_operand.vmem [shape: f32[1,32], index: 4, kind: input, shape index: {}]
  %s5 = inlined_call_operand.hbm [shape: f32[16,32], index: 5, kind: output, shape index: {}]
  %s6 = sld [smem:[#allocation0]]
  $region30: #{tpu_custom_call.1} parent=0
    _
  %s8 = ssub.s32 1, %s6
  %s9 = scalar_select 0, %s8, %s6
  $region1: #{tpu_custom_call.1} parent=0
    #allocation2 [shape = 'u8[8192]{0}', space=vmem, size = 0x2000, scoped, tag = 'output window, operand 0, single buffered']
    #allocation3 [shape = 's32[1]{0}', space=sflag, size = 0x4, scoped, tag = 'scoped memory for tpu_custom_call.1']
    %10 = vsyncpa [#allocation3], 0
    // Predicated region
    $region2: #{tpu_custom_call.1} parent=1 // pred_check
      _
    $region3: #{tpu_custom_call.1} parent=1 // pred_check_branch
      %12 = sbr.rel (0) target = $region5
    $region4: #{tpu_custom_call.1} parent=1 // pred_region
      _
    $region5: #{tpu_custom_call.1} parent=1 // pred_fallthru
      _
    // Predicated region
    $region6: #{tpu_custom_call.1} parent=1 // pred_check
      _
    $region7: #{tpu_custom_call.1} parent=1 // pred_check_branch
      %14 = sbr.rel (0) target = $region9
    $region8: #{tpu_custom_call.1} parent=1 // pred_region
      _
    $region9: #{tpu_custom_call.1} parent=1 // pred_fallthru
      _
    // Predicated region
    $region10: #{tpu_custom_call.1} parent=1 // pred_check
      _
    $region11: #{tpu_custom_call.1} parent=1 // pred_check_branch
      %16 = sbr.rel (0) target = $region13
    $region12: #{tpu_custom_call.1} parent=1 // pred_region
      _
    $region13: #{tpu_custom_call.1} parent=1 // pred_fallthru
      _
    // Predicated region
    $region14: #{tpu_custom_call.1} parent=1 // pred_check
      _
    $region15: #{tpu_custom_call.1} parent=1 // pred_check_branch
      %18 = sbr.rel (0) target = $region17
    $region16: #{tpu_custom_call.1} parent=1 // pred_region
      _
    $region17: #{tpu_custom_call.1} parent=1 // pred_fallthru
      _
    // Predicated region
    $region18: #{tpu_custom_call.1} parent=1 // pred_check
      _
    $region19: #{tpu_custom_call.1} parent=1 // pred_check_branch
      %20 = sbr.rel (0) target = $region21
    $region20: #{tpu_custom_call.1} parent=1 // pred_region
      _
    $region21: #{tpu_custom_call.1} parent=1 // pred_fallthru
      _
    %v21 = vld [vmem:[%s0] sm:$0xff]
    %v22 = vld [vmem:[%s0 + $0x8] sm:$0xff]
    %v23 = vld [vmem:[%s1] sm:$0xff]
    %v24 = vld [vmem:[%s1 + $0x8] sm:$0xff]
    %v25 = vld [vmem:[%s1 + $0x10] sm:$0xff]
    %v26 = vld [vmem:[%s1 + $0x18] sm:$0xff]
    %v27 = vld [vmem:[%s1 + $0x20] sm:$0xff]
    %v28 = vld [vmem:[%s1 + $0x28] sm:$0xff]
    %v29 = vld [vmem:[%s1 + $0x30] sm:$0xff]
    %v30 = vld [vmem:[%s1 + $0x38] sm:$0xff]
    %v31 = vld [vmem:[%s2] sm:$0x3]
    %v33 = vlaneseq
    %v34 = vshrl.u32 %v33, 7
    %v35 = vsub.s32 0, %v34
    %v36 = vrot.slane %v31, %v35
    %v37 = vlaneseq
    %v38 = vshrl.u32 %v37, 7
    %v39 = vsub.s32 1, %v38
    %v40 = vrot.slane %v31, %v39
    %vm43 = vcmask 261120
    %v45 = vsel %vm43, %v21, 0
    %v48 = vsel %vm43, %v22, 0
    %50 = vmatprep.subr.mxu0 0.0
    %51 = vmatpush1.msra.mxu0 0.0
    %52 = vmatprep.subr.mxu0 0.0
    %53 = vmatpush1.msra.mxu0 0.0
    %54 = vmatprep.subr.mxu0 0.0
    %55 = vmatpush1.msra.mxu0 0.0
    %56 = vmatprep.subr.mxu0 0.0
    %57 = vmatpush1.msra.mxu0 0.0
    %58 = vmatprep.subr.mxu0 0.0
    %59 = vmatpush1.msra.mxu0 0.0
    %60 = vmatprep.subr.mxu0 0.0
    %61 = vmatpush1.msra.mxu0 0.0
    %62 = vmatprep.subr.mxu0 0.0
    %63 = vmatpush1.msra.mxu0 0.0
    %64 = vmatprep.subr.mxu0 0.0
    %65 = vmatpush1.msra.mxu0 0.0
    %66 = vmatprep.subr.mxu0 0.0
    %67 = vmatpush1.msra.mxu0 0.0
    %68 = vmatprep.subr.mxu0 0.0
    %69 = vmatpush1.msra.mxu0 0.0
    %70 = vmatprep.subr.mxu0 0.0
    %71 = vmatpush1.msra.mxu0 0.0
    %72 = vmatprep.subr.mxu0 0.0
    %73 = vmatpush1.msra.mxu0 0.0
    %74 = vmatprep.subr.mxu0 %v30
    %75 = vmatpush1.msra.mxu0 %v29
    %76 = vmatprep.subr.mxu0 %v28
    %77 = vmatpush1.msra.mxu0 %v27
    %78 = vmatprep.subr.mxu0 %v26
    %79 = vmatpush1.msra.mxu0 %v25
    %80 = vmatprep.subr.mxu0 %v24
    %81 = vmatpush1.msra.mxu0 %v23
    %82 = vmatprep.subr.mxu0 0.0
    %83 = vmatpush2.msra.mxu0 0.0
    %84 = vmatprep.subr.mxu0 0.0
    %85 = vmatpush2.msra.mxu0 0.0
    %86 = vmatprep.subr.mxu0 0.0
    %87 = vmatpush2.msra.mxu0 0.0
    %88 = vmatprep.subr.mxu0 0.0
    %89 = vmatpush2.msra.mxu0 0.0
    %90 = vmatprep.subr.mxu0 0.0
    %91 = vmatpush2.msra.mxu0 0.0
    %92 = vmatprep.subr.mxu0 0.0
    %93 = vmatpush2.msra.mxu0 0.0
    %94 = vmatprep.subr.mxu0 0.0
    %95 = vmatpush2.msra.mxu0 0.0
    %96 = vmatprep.subr.mxu0 0.0
    %97 = vmatpush2.msra.mxu0 0.0
    %98 = vmatprep.subr.mxu0 0.0
    %99 = vmatpush2.msra.mxu0 0.0
    %100 = vmatprep.subr.mxu0 0.0
    %101 = vmatpush2.msra.mxu0 0.0
    %102 = vmatprep.subr.mxu0 0.0
    %103 = vmatpush2.msra.mxu0 0.0
    %104 = vmatprep.subr.mxu0 0.0
    %105 = vmatpush2.msra.mxu0 0.0
    %106 = vmatprep.subr.mxu0 0.0
    %107 = vmatpush2.msra.mxu0 0.0
    %108 = vmatprep.subr.mxu0 0.0
    %109 = vmatpush2.msra.mxu0 0.0
    %110 = vmatprep.subr.mxu0 0.0
    %111 = vmatpush2.msra.mxu0 0.0
    %112 = vmatprep.subr.mxu0 0.0
    %113 = vmatpush2.msra.mxu0 0.0
    %114 = vmatprep.mubr.f32.mxu0 0.0
    %115 = vmatmul.mubr.f32.gmra.mxu0 %v45
    %v116 = vpop.f32.mrf.mxu0
    %v117 = vadd.f32 %v36, %v116
    %v118 = vpop.f32.mrf.mxu0
    %v119 = vadd.f32 %v40, %v118
    %120 = vmatprep.mubr.f32.mxu0 0.0
    %121 = vmatmul.mubr.f32.gmra.mxu0 %v48
    %v122 = vpop.f32.mrf.mxu0
    %v123 = vadd.f32 %v36, %v122
    %v124 = vpop.f32.mrf.mxu0
    %v125 = vadd.f32 %v40, %v124
    %126 = vdwg.mxu0
    %v127 = vxor.u32 %v117, 2147483648
    %v128 = vxor.u32 %v123, 2147483648
    %v129 = vmul.f32 %v127, 1.442695
    %v130 = vpow.pop %v129
    %v131 = vmul.f32 %v128, 1.442695
    %v132 = vpow.pop %v131
    %v133 = vadd.f32 %v130, 1.0
    %v134 = vadd.f32 %v132, 1.0
    %v135 = vrcp.pop %v133
    %v136 = vmul.f32 1.0, %v135
    %v137 = vrcp.pop %v134
    %v138 = vmul.f32 1.0, %v137
    %v139 = vmul.f32 %v117, %v136
    %v140 = vmul.f32 %v123, %v138
    %v141 = vmul.f32 %v139, %v119
    %v142 = vmul.f32 %v140, %v125
    %v143 = vld [vmem:[%s3] sm:$0xff]
    %v144 = vld [vmem:[%s3 + $0x8] sm:$0xff]
    %v145 = vld [vmem:[%s3 + $0x10] sm:$0xff]
    %v146 = vld [vmem:[%s3 + $0x18] sm:$0xff]
    %v147 = vld [vmem:[%s3 + $0x20] sm:$0xff]
    %v148 = vld [vmem:[%s3 + $0x28] sm:$0xff]
    %v149 = vld [vmem:[%s3 + $0x30] sm:$0xff]
    %v150 = vld [vmem:[%s3 + $0x38] sm:$0xff]
    %v151 = vld [vmem:[%s3 + $0x40] sm:$0xff]
    %v152 = vld [vmem:[%s3 + $0x48] sm:$0xff]
    %v153 = vld [vmem:[%s3 + $0x50] sm:$0xff]
    %v154 = vld [vmem:[%s3 + $0x58] sm:$0xff]
    %v155 = vld [vmem:[%s3 + $0x60] sm:$0xff]
    %v156 = vld [vmem:[%s3 + $0x68] sm:$0xff]
    %v157 = vld [vmem:[%s3 + $0x70] sm:$0xff]
    %v158 = vld [vmem:[%s3 + $0x78] sm:$0xff]
    %v159 = vld [vmem:[%s4] sm:$0x1]
    %v161 = vlaneseq
    %v162 = vshrl.u32 %v161, 7
    %v163 = vsub.s32 0, %v162
    %v164 = vrot.slane %v159, %v163
    %166 = vmatprep.subr.mxu0 0.0
    %167 = vmatpush1.msra.mxu0 %v158
    %168 = vmatprep.subr.mxu0 0.0
    %169 = vmatpush1.msra.mxu0 %v157
    %170 = vmatprep.subr.mxu0 0.0
    %171 = vmatpush1.msra.mxu0 %v156
    %172 = vmatprep.subr.mxu0 0.0
    %173 = vmatpush1.msra.mxu0 %v155
    %174 = vmatprep.subr.mxu0 0.0
    %175 = vmatpush1.msra.mxu0 %v154
    %176 = vmatprep.subr.mxu0 0.0
    %177 = vmatpush1.msra.mxu0 %v153
    %178 = vmatprep.subr.mxu0 0.0
    %179 = vmatpush1.msra.mxu0 %v152
    %180 = vmatprep.subr.mxu0 0.0
    %181 = vmatpush1.msra.mxu0 %v151
    %182 = vmatprep.subr.mxu0 0.0
    %183 = vmatpush1.msra.mxu0 %v150
    %184 = vmatprep.subr.mxu0 0.0
    %185 = vmatpush1.msra.mxu0 %v149
    %186 = vmatprep.subr.mxu0 0.0
    %187 = vmatpush1.msra.mxu0 %v148
    %188 = vmatprep.subr.mxu0 0.0
    %189 = vmatpush1.msra.mxu0 %v147
    %190 = vmatprep.subr.mxu0 0.0
    %191 = vmatpush1.msra.mxu0 %v146
    %192 = vmatprep.subr.mxu0 0.0
    %193 = vmatpush1.msra.mxu0 %v145
    %194 = vmatprep.subr.mxu0 0.0
    %195 = vmatpush1.msra.mxu0 %v144
    %196 = vmatprep.subr.mxu0 0.0
    %197 = vmatpush1.msra.mxu0 %v143
    %198 = vmatprep.subr.mxu0 0.0
    %199 = vmatpush2.msra.mxu0 0.0
    %200 = vmatprep.subr.mxu0 0.0
    %201 = vmatpush2.msra.mxu0 0.0
    %202 = vmatprep.subr.mxu0 0.0
    %203 = vmatpush2.msra.mxu0 0.0
    %204 = vmatprep.subr.mxu0 0.0
    %205 = vmatpush2.msra.mxu0 0.0
    %206 = vmatprep.subr.mxu0 0.0
    %207 = vmatpush2.msra.mxu0 0.0
    %208 = vmatprep.subr.mxu0 0.0
    %209 = vmatpush2.msra.mxu0 0.0
    %210 = vmatprep.subr.mxu0 0.0
    %211 = vmatpush2.msra.mxu0 0.0
    %212 = vmatprep.subr.mxu0 0.0
    %213 = vmatpush2.msra.mxu0 0.0
    %214 = vmatprep.subr.mxu0 0.0
    %215 = vmatpush2.msra.mxu0 0.0
    %216 = vmatprep.subr.mxu0 0.0
    %217 = vmatpush2.msra.mxu0 0.0
    %218 = vmatprep.subr.mxu0 0.0
    %219 = vmatpush2.msra.mxu0 0.0
    %220 = vmatprep.subr.mxu0 0.0
    %221 = vmatpush2.msra.mxu0 0.0
    %222 = vmatprep.subr.mxu0 0.0
    %223 = vmatpush2.msra.mxu0 0.0
    %224 = vmatprep.subr.mxu0 0.0
    %225 = vmatpush2.msra.mxu0 0.0
    %226 = vmatprep.subr.mxu0 0.0
    %227 = vmatpush2.msra.mxu0 0.0
    %228 = vmatprep.subr.mxu0 0.0
    %229 = vmatpush2.msra.mxu0 0.0
    %230 = vmatprep.mubr.f32.mxu0 0.0
    %231 = vmatmul.mubr.f32.gmra.mxu0 %v141
    %v232 = vpop.f32.mrf.mxu0
    %v233 = vadd.f32 %v164, %v232
    %v234 = vpop.f32.mrf.mxu0
    %235 = vmatprep.mubr.f32.mxu0 0.0
    %236 = vmatmul.mubr.f32.gmra.mxu0 %v142
    %v237 = vpop.f32.mrf.mxu0
    %v238 = vadd.f32 %v164, %v237
    %v239 = vpop.f32.mrf.mxu0
    %240 = vdwg.mxu0
    %241 = vst.msk [vmem:[#allocation2] sm:$0xff] %vm43, %v233
    %242 = vst.msk [vmem:[#allocation2 + $0x8] sm:$0xff] %vm43, %v238
    // Predicated region
    $region22: #{tpu_custom_call.1} parent=1 // pred_check
      _
    $region23: #{tpu_custom_call.1} parent=1 // pred_check_branch
      %244 = sbr.rel (0) target = $region25
    $region24: #{tpu_custom_call.1} parent=1 // pred_region
      %s246 = ssub.s32 256, 256
      %247 = vsyncadd [#allocation3], %s246
      %s248 = sshll.u32 [#allocation2], 4
      %s249 = int_to_ptr.vmem [resolvable:$true] %s248
      %254 = dma.vmem_to_hbm [thread:$0]  %s249, 256, %s5, [#allocation3], 128, 128, 8
    $region25: #{tpu_custom_call.1} parent=1 // pred_fallthru
      _
    // Predicated region
    $region26: #{tpu_custom_call.1} parent=1 // pred_check
      _
    $region27: #{tpu_custom_call.1} parent=1 // pred_check_branch
      %256 = sbr.rel (0) target = $region29
    $region28: #{tpu_custom_call.1} parent=1 // pred_region
      %257 = dma.done [#allocation3], 256
    $region29: #{tpu_custom_call.1} parent=1 // pred_fallthru
      _
    %258 = vsyncpa [#allocation3], 1

</llo_original>
